<compile_context>
chip_gen: v6e
topology: v6e:2x2x1
jax: 0.10.0
libtpu: 0.0.40
codegen_flags: <defaults>
</compile_context>

<pallas_src>
import functools

import jax
import jax.numpy as jnp
from jax.experimental import pallas as pl
from jax.experimental.pallas import tpu as pltpu

BN_EPS = 1e-5
LANE = 128


def _round_up(n, m):
    return ((n + m - 1) // m) * m


def _pad_to(x, shape):
    return jnp.pad(x, [(0, s - d) for s, d in zip(shape, x.shape)])


def _vmem_limit_bytes():
    """Per-generation VMEM budget: ~7/8 of physical capacity.

    v5e/v6e (128 MiB) -> ~112 MiB, v7x (64 MiB per TC) -> ~56 MiB.  The
    remaining 1/8 is headroom for Mosaic internal scratch and f32 temporaries.
    """
    cap = None
    try:
        cap = getattr(pltpu.get_tpu_info(), "vmem_capacity_bytes", None)
    except Exception:  # query unavailable -> conservative default
        cap = None
    if not cap:
        cap = 128 * 1024 * 1024
    return int(cap) * 7 // 8


def _largest_dividing_tile(n_pad, target):
    """Largest multiple of LANE that divides n_pad and is <= max(target, LANE)."""
    best = LANE
    t = LANE
    limit = max(int(target), LANE)
    while t <= min(limit, n_pad):
        if n_pad % t == 0:
            best = t
        t += LANE
    return best


# ----------------------------------------------------------------------------
# Resident path: A_hat lives in VMEM, all layers fused in one pallas_call.
# ----------------------------------------------------------------------------
def _resident_gcn_kernel(a_hbm, z0_ref, w_ref, b_ref, o_ref,
                         a_scr, z_scr, h_scr, *, tm, num_layers):
    """grid = (num_layers, n_pad // tm); per (l, i):

        o[i] = relu(A[i*tm:(i+1)*tm, :] @ Z_l + b_l),   Z_l = H_l @ W_l

    (BatchNorm folded into W/b; dropout is identity in eval mode).
    """
    l = pl.program_id(0)
    i = pl.program_id(1)
    row0 = pl.multiple_of(i * tm, tm)

    # One-time: pull the whole normalized adjacency into VMEM (single copy,
    # no double buffering) and seed Z_0 (precomputed as X @ W_0 in the wrapper).
    @pl.when(jnp.logical_and(l == 0, i == 0))
    def _():
        pltpu.sync_copy(a_hbm, a_scr)
        z_scr[...] = z0_ref[...]

    # Start of each later layer: Z_l = H_l @ W_l, chunked so the f32 matmul
    # intermediate stays small.
    if num_layers > 1:
        @pl.when(jnp.logical_and(l > 0, i == 0))
        def _():
            n_tiles = z_scr.shape[0] // tm

            @pl.loop(0, n_tiles)
            def _(j):
                r0 = pl.multiple_of(j * tm, tm)
                z_scr[pl.ds(r0, tm), :] = jnp.dot(
                    h_scr[pl.ds(r0, tm), :], w_ref[0],
                    preferred_element_type=jnp.float32).astype(z_scr.dtype)

    # Propagation for this row tile.
    a_tile = a_scr[pl.ds(row0, tm), :]
    p = jnp.dot(a_tile, z_scr[...], preferred_element_type=jnp.float32)
    act = jnp.maximum(p + b_ref[0], 0.0)

    if num_layers > 1:
        h_scr[pl.ds(row0, tm), :] = act.astype(h_scr.dtype)
    # Written every layer; the last layer's write lands last so the final HBM
    # contents are correct (wasted earlier writebacks are O(N*128) << O(N^2)).
    o_ref[...] = act.astype(o_ref.dtype)


def _gcn_forward_resident(a_p, z0_p, params, vmem_limit, out_dtype):
    n_pad = a_p.shape[0]
    h_pad = z0_p.shape[1]
    num_layers = len(params)

    # Tall row tiles amortize MXU fill/drain over the narrow 128-wide RHS.
    tm = _largest_dividing_tile(n_pad, 512)
    n_tiles = n_pad // tm

    # w_stack[0] is a dummy (layer 0's feature transform is done in the wrapper).
    w_stack = jnp.zeros((num_layers, h_pad, h_pad), jnp.bfloat16)
    for l in range(1, num_layers):
        w_l = params[l][0]
        w_stack = w_stack.at[l].set(
            _pad_to(w_l, (h_pad, h_pad)).astype(jnp.bfloat16))
    b_stack = jnp.stack(
        [_pad_to(b.reshape(1, -1), (1, h_pad)).astype(jnp.float32)
         for _, b in params], axis=0)                        # (L, 1, h_pad)

    flops = (num_layers * 2 * n_pad * n_pad * h_pad
             + max(num_layers - 1, 0) * 2 * n_pad * h_pad * h_pad)
    bytes_accessed = (a_p.size * 2 + z0_p.size * 2 + w_stack.size * 2
                      + b_stack.size * 4
                      + n_pad * h_pad * jnp.dtype(out_dtype).itemsize)

    h_scr_shape = (n_pad, h_pad) if num_layers > 1 else (8, LANE)

    out = pl.pallas_call(
        functools.partial(_resident_gcn_kernel, tm=tm, num_layers=num_layers),
        grid=(num_layers, n_tiles),
        in_specs=[
            pl.BlockSpec(memory_space=pl.ANY),                        # A (HBM)
            pl.BlockSpec((n_pad, h_pad), lambda l, i: (0, 0)),        # Z_0
            pl.BlockSpec((1, h_pad, h_pad), lambda l, i: (l, 0, 0)),  # W_l
            pl.BlockSpec((1, 1, h_pad), lambda l, i: (l, 0, 0)),      # b_l
        ],
        out_specs=pl.BlockSpec((tm, h_pad), lambda l, i: (i, 0)),
        out_shape=jax.ShapeDtypeStruct((n_pad, h_pad), out_dtype),
        scratch_shapes=[
            pltpu.VMEM((n_pad, n_pad), jnp.bfloat16),   # resident A_hat
            pltpu.VMEM((n_pad, h_pad), jnp.bfloat16),   # Z_l
            pltpu.VMEM(h_scr_shape, jnp.bfloat16),      # H_l
        ],
        compiler_params=pltpu.CompilerParams(
            dimension_semantics=("arbitrary", "arbitrary"),
            vmem_limit_bytes=vmem_limit),
        cost_estimate=pl.CostEstimate(flops=int(flops), transcendentals=0,
                                      bytes_accessed=int(bytes_accessed)),
    )(a_p, z0_p, w_stack, b_stack)
    return out


# ----------------------------------------------------------------------------
# Streamed path: A_hat row-tiled from HBM, one pallas_call per layer.
# ----------------------------------------------------------------------------
def _streamed_layer_kernel(a_ref, z_ref, b_ref, o_ref):
    """One GCN layer, adjacency streamed in row tiles: o[i] = relu(A[i] @ Z + b)."""
    p = jnp.dot(a_ref[...], z_ref[...], preferred_element_type=jnp.float32)
    o_ref[...] = jnp.maximum(p + b_ref[...], 0.0).astype(o_ref.dtype)


def _pick_streamed_tile(n_pad, h_pad, vmem_limit):
    # Budget: double-buffered A row tile + out tile, resident Z (conservatively
    # counted twice), plus fixed headroom.
    avail = vmem_limit - 2 * n_pad * h_pad * 2 - (8 << 20)
    per_row = 2 * n_pad * 2 + 2 * h_pad * 4
    cap = avail // per_row if avail > 0 else LANE
    return _largest_dividing_tile(n_pad, min(1024, cap))


def _gcn_forward_streamed(a_p, x, params, vmem_limit, out_dtype):
    """Per-layer pallas_call; row-tile axis 'parallel' (v7x dual-TC).

    Inter-layer activations pass through HBM in bf16 (N*128*2 bytes, negligible
    next to the N^2 adjacency traffic).
    """
    n_pad = a_p.shape[0]
    num_layers = len(params)
    h = None
    for l, (w, b) in enumerate(params):
        h_out_pad = _round_up(w.shape[1], LANE)
        tm = _pick_streamed_tile(n_pad, h_out_pad, vmem_limit)
        b_p = _pad_to(b.reshape(1, -1), (1, h_out_pad)).astype(jnp.float32)
        # Feature transform Z_l = H_l @ W_l in plain XLA: O(N*H^2), negligible
        # against the O(N^2*H) propagation the kernel does.
        if l == 0:
            z = jnp.dot(x, w, preferred_element_type=jnp.float32)
            z_p = _pad_to(z, (n_pad, h_out_pad)).astype(jnp.bfloat16)
        else:
            w_p = _pad_to(w, (h.shape[1], h_out_pad)).astype(jnp.bfloat16)
            z_p = jnp.dot(h, w_p,
                          preferred_element_type=jnp.float32).astype(jnp.bfloat16)
        layer_dtype = out_dtype if l == num_layers - 1 else jnp.bfloat16
        flops = 2 * n_pad * n_pad * h_out_pad
        bytes_accessed = (a_p.size * 2 + z_p.size * 2 + b_p.size * 4
                          + n_pad * h_out_pad * jnp.dtype(layer_dtype).itemsize)
        h = pl.pallas_call(
            _streamed_layer_kernel,
            grid=(n_pad // tm,),
            in_specs=[
                pl.BlockSpec((tm, n_pad), lambda i: (i, 0)),         # A row tile
                pl.BlockSpec((n_pad, h_out_pad), lambda i: (0, 0)),  # Z_l
                pl.BlockSpec((1, h_out_pad), lambda i: (0, 0)),      # b_l
            ],
            out_specs=pl.BlockSpec((tm, h_out_pad), lambda i: (i, 0)),
            out_shape=jax.ShapeDtypeStruct((n_pad, h_out_pad), layer_dtype),
            compiler_params=pltpu.CompilerParams(
                dimension_semantics=("parallel",),
                vmem_limit_bytes=vmem_limit),
            cost_estimate=pl.CostEstimate(flops=int(flops), transcendentals=0,
                                          bytes_accessed=int(bytes_accessed)),
        )(a_p, z_p, b_p)
    return h


# ----------------------------------------------------------------------------
# Dispatcher + model glue
# ----------------------------------------------------------------------------
def gcn_forward(a_hat, x, params, *, out_dtype=jnp.bfloat16, force_stream=False):
    """ClientGCN forward (eval mode).

    a_hat : (N, N) f32 normalized adjacency
    x     : (N, C) f32 node features
    params: list of (W_folded (C_in, H), b_folded (H,)) with BN pre-folded
    returns (N, H) in `out_dtype`
    """
    n = x.shape[0]
    hidden = params[-1][0].shape[1]
    n_pad = _round_up(n, LANE)
    h_pad = _round_up(hidden, LANE)

    a_p = _pad_to(a_hat, (n_pad, n_pad)).astype(jnp.bfloat16)

    vmem_limit = _vmem_limit_bytes()
    tm_res = _largest_dividing_tile(n_pad, 512)
    resident_need = (
        n_pad * n_pad * 2           # resident A_hat scratch (bf16, single copy)
        + 4 * n_pad * h_pad * 2     # Z/H scratch + double-buffered Z_0 input
        + 2 * tm_res * n_pad * 2    # headroom: A-tile slice materialization
        + 6 * tm_res * h_pad * 4    # f32 matmul temporaries + out tiles
        + (8 << 20))                # Mosaic internal scratch headroom
    use_resident = (not force_stream) and resident_need <= vmem_limit

    if use_resident:
        w0 = params[0][0]
        # Layer-0 feature transform in the wrapper (avoids padding the
        # contraction dim from C_in up to 128 inside the kernel).
        z0 = jnp.dot(x, w0, preferred_element_type=jnp.float32)
        z0_p = _pad_to(z0, (n_pad, h_pad)).astype(jnp.bfloat16)
        out_p = _gcn_forward_resident(a_p, z0_p, params, vmem_limit, out_dtype)
    else:
        out_p = _gcn_forward_streamed(a_p, x, params, vmem_limit, out_dtype)
    return out_p[:n, :hidden]


def build_normalized_adjacency(edge_index, num_nodes):
    """Dense D^-1/2 (A + I) D^-1/2, matching PyG GCNConv gcn_norm defaults.

    Pre-existing self-loops in edge_index are dropped before the canonical
    self-loops are added (add_remaining_self_loops semantics), so they are not
    double-counted.
    """
    src, dst = edge_index[0], edge_index[1]
    ew = jnp.where(src == dst, 0.0, 1.0).astype(jnp.float32)
    loops = jnp.arange(num_nodes, dtype=src.dtype)
    src = jnp.concatenate([src, loops])
    dst = jnp.concatenate([dst, loops])
    ew = jnp.concatenate([ew, jnp.ones((num_nodes,), jnp.float32)])
    deg = jnp.zeros((num_nodes,), jnp.float32).at[dst].add(ew)
    dinv = jnp.where(deg > 0, 1.0 / jnp.sqrt(deg), 0.0)
    norm = ew * dinv[src] * dinv[dst]
    # out[target] += norm * x[source]  =>  A_hat[target, source] = norm
    a_hat = jnp.zeros((num_nodes, num_nodes), jnp.float32).at[dst, src].add(norm)
    return a_hat


class ClientGCNPallas:
    """Deterministically-initialized ClientGCN (inference / eval mode).

    Eval-mode BatchNorm1d is folded into each GCNConv's weight/bias at build
    time (exact, since per-channel scaling commutes with A_hat @ (.)), and
    F.dropout(training=False) is the identity, so each layer is
    relu(A_hat @ (H @ W') + b').
    """

    def __init__(self, in_channels, hidden_channels, num_layers=3, dropout=0.5,
                 seed=0):
        self.num_layers = num_layers
        self.dropout = dropout  # identity in eval mode
        key = jax.random.PRNGKey(seed)
        self.params = []        # list of (w_folded, b_folded)
        c_in = in_channels
        for _ in range(num_layers):
            key, kw, kb, kg = jax.random.split(key, 4)
            w = jax.random.normal(kw, (c_in, hidden_channels), jnp.float32) * 0.1
            b = jax.random.normal(kb, (hidden_channels,), jnp.float32) * 0.01
            gamma = 1.0 + 0.05 * jax.random.normal(kg, (hidden_channels,),
                                                   jnp.float32)
            beta = jnp.zeros((hidden_channels,), jnp.float32)
            running_mean = jnp.zeros((hidden_channels,), jnp.float32)
            running_var = jnp.ones((hidden_channels,), jnp.float32)
            scale = gamma * jax.lax.rsqrt(running_var + BN_EPS)
            w_fold = w * scale[None, :]
            b_fold = (b - running_mean) * scale + beta
            self.params.append((w_fold, b_fold))
            c_in = hidden_channels

    def __call__(self, x, edge_index, force_stream=False):
        n = x.shape[0]
        a_hat = build_normalized_adjacency(edge_index, n)
        return gcn_forward(a_hat, x, self.params, force_stream=force_stream)


if __name__ == "__main__":
    # Small, module-consistent shapes: N nodes, csv-like feature count,
    # hidden_channels=64 and num_layers=2 as in the driver script.
    N = 128
    IN_CHANNELS = 16
    HIDDEN = 64
    NUM_LAYERS = 2
    NUM_EDGES = 512

    key = jax.random.PRNGKey(0)
    k_x, k_src, k_dst = jax.random.split(key, 3)
    x = jax.random.normal(k_x, (N, IN_CHANNELS), jnp.float32)
    src = jax.random.randint(k_src, (NUM_EDGES,), 0, N, dtype=jnp.int32)
    dst = jax.random.randint(k_dst, (NUM_EDGES,), 0, N, dtype=jnp.int32)
    edge_index = jnp.stack([src, dst], axis=0)  # (2, E), like PyG edge_index

    model = ClientGCNPallas(IN_CHANNELS, HIDDEN, num_layers=NUM_LAYERS,
                            dropout=0.2, seed=0)

    # Resident-A fused path (small graph: A_hat fits in VMEM).
    out_res = jax.block_until_ready(model(x, edge_index))
    # Streamed / row-tiled grid path (what large graphs would take).
    out_str = jax.block_until_ready(model(x, edge_index, force_stream=True))

    assert out_res.shape == (N, HIDDEN) and out_str.shape == (N, HIDDEN)
    assert bool(jnp.all(jnp.isfinite(out_res.astype(jnp.float32))))
    assert bool(jnp.all(jnp.isfinite(out_str.astype(jnp.float32))))

    # Cross-check both kernel paths against a pure-JAX f32 reference.
    a_hat = build_normalized_adjacency(edge_index, N)
    h_ref = x
    for w, b in model.params:
        h_ref = jnp.maximum(a_hat @ (h_ref @ w) + b[None, :], 0.0)
    out_res_f = out_res.astype(jnp.float32)
    out_str_f = out_str.astype(jnp.float32)
    err_res = float(jnp.max(jnp.abs(out_res_f - h_ref)))
    err_str = float(jnp.max(jnp.abs(out_str_f - h_ref)))
    err_xpath = float(jnp.max(jnp.abs(out_res_f - out_str_f)))
    assert err_res < 0.15 and err_str < 0.15 and err_xpath < 0.05, (
        err_res, err_str, err_xpath)
    print("KERNEL_OK")
</pallas_src>

<mosaic_0001>
module attributes {stable_mosaic.version = 11 : i64} {
  func.func @_resident_gcn_kernel(%arg0: i32, %arg1: i32, %arg2: memref<128x128xbf16, #tpu.memory_space<any>>, %arg3: memref<128x128xbf16, #tpu.memory_space<vmem>>, %arg4: memref<1x128x128xbf16, #tpu.memory_space<vmem>>, %arg5: memref<1x1x128xf32, #tpu.memory_space<vmem>>, %arg6: memref<128x128xbf16, #tpu.memory_space<vmem>>, %arg7: memref<128x128xbf16, #tpu.memory_space<vmem>>, %arg8: memref<128x128xbf16, #tpu.memory_space<vmem>>, %arg9: memref<128x128xbf16, #tpu.memory_space<vmem>>) attributes {dimension_semantics = [#tpu.dimension_semantics<arbitrary>, #tpu.dimension_semantics<arbitrary>], iteration_bounds = array<i64: 2, 1>, scalar_prefetch = 0 : i64, scratch_operands = 3 : i64, tpu.core_type = #tpu.core_type<tc>, window_params = [{}, {pipeline_mode = #tpu.pipeline_mode<synchronous>, transform_indices = @transform_1, window_bounds = array<i64: 128, 128>}, {transform_indices = @transform_2, window_bounds = array<i64: 1, 128, 128>}, {transform_indices = @transform_3, window_bounds = array<i64: 1, 1, 128>}, {transform_indices = @transform_4, window_bounds = array<i64: 128, 128>}]} {
    %c128_i32 = arith.constant 128 : i32
    %0 = arith.muli %arg1, %c128_i32 : i32
    %1 = tpu.assume_multiple %0, 128 : i32
    %c0_i32 = arith.constant 0 : i32
    %2 = arith.cmpi eq, %arg0, %c0_i32 : i32
    %c0_i32_0 = arith.constant 0 : i32
    %3 = arith.cmpi eq, %arg1, %c0_i32_0 : i32
    %4 = arith.andi %2, %3 : i1
    %5 = arith.extui %4 : i1 to i32
    %c0_i32_1 = arith.constant 0 : i32
    %6 = arith.cmpi ne, %5, %c0_i32_1 : i32
    scf.if %6 {
      "tpu.region"() ({
        %29 = tpu.sem_alloc : memref<!tpu.dma_semaphore, #tpu.memory_space<semaphore_mem>>
        tpu.enqueue_dma source(%arg2 : memref<128x128xbf16, #tpu.memory_space<any>>) target(%arg7 : memref<128x128xbf16, #tpu.memory_space<vmem>>) target_semaphore(%29 : memref<!tpu.dma_semaphore, #tpu.memory_space<semaphore_mem>>)
        tpu.wait_dma2 semaphore(%29 : memref<!tpu.dma_semaphore, #tpu.memory_space<semaphore_mem>>) src(%arg2 : memref<128x128xbf16, #tpu.memory_space<any>>) dst(%arg7 : memref<128x128xbf16, #tpu.memory_space<vmem>>)
        tpu.yield
      }) : () -> ()
      %c0_14 = arith.constant 0 : index
      %c0_15 = arith.constant 0 : index
      %27 = vector.load %arg3[%c0_14, %c0_15] : memref<128x128xbf16, #tpu.memory_space<vmem>>, vector<128x128xbf16>
      %c0_16 = arith.constant 0 : index
      %c0_17 = arith.constant 0 : index
      %28 = vector.load %arg8[%c0_16, %c0_17] : memref<128x128xbf16, #tpu.memory_space<vmem>>, vector<128x128xbf16>
      tpu.vector_store %arg8[%c0_16, %c0_17], %27 {strides = array<i32>} : memref<128x128xbf16, #tpu.memory_space<vmem>>, vector<128x128xbf16>,
    } else {
    }
    %c0_i32_2 = arith.constant 0 : i32
    %7 = arith.cmpi sgt, %arg0, %c0_i32_2 : i32
    %c0_i32_3 = arith.constant 0 : i32
    %8 = arith.cmpi eq, %arg1, %c0_i32_3 : i32
    %9 = arith.andi %7, %8 : i1
    %10 = arith.extui %9 : i1 to i32
    %c0_i32_4 = arith.constant 0 : i32
    %11 = arith.cmpi ne, %10, %c0_i32_4 : i32
    scf.if %11 {
      %c0_i32_14 = arith.constant 0 : i32
      %c1_i32 = arith.constant 1 : i32
      %27 = arith.muli %c0_i32_14, %c1_i32 : i32
      %c0_i32_15 = arith.constant 0 : i32
      %28 = arith.addi %c0_i32_15, %27 : i32
      %c128_i32_16 = arith.constant 128 : i32
      %29 = arith.muli %28, %c128_i32_16 : i32
      %30 = tpu.assume_multiple %29, 128 : i32
      %31 = arith.index_cast %30 : i32 to index
      %c0_17 = arith.constant 0 : index
      %32 = vector.load %arg9[%31, %c0_17] : memref<128x128xbf16, #tpu.memory_space<vmem>>, vector<128x128xbf16>
      %c0_18 = arith.constant 0 : index
      %c0_19 = arith.constant 0 : index
      %c0_20 = arith.constant 0 : index
      %33 = vector.load %arg4[%c0_18, %c0_19, %c0_20] : memref<1x128x128xbf16, #tpu.memory_space<vmem>>, vector<1x128x128xbf16>
      %34 = vector.shape_cast %33 : vector<1x128x128xbf16> to vector<128x128xbf16>
      %cst_21 = arith.constant dense<0.000000e+00> : vector<128x128xf32>
      %35 = tpu.matmul %32, %34, %cst_21 {dimension_numbers = #tpu.dot_dimension_numbers<[1], [0], [0], [1], [0, 0, 1, 1], [], []>} : vector<128x128xbf16>, vector<128x128xbf16>, vector<128x128xf32> -> vector<128x128xf32>
      %36 = arith.truncf %35 : vector<128x128xf32> to vector<128x128xbf16>
      %37 = arith.index_cast %30 : i32 to index
      %c0_22 = arith.constant 0 : index
      %38 = vector.load %arg8[%37, %c0_22] : memref<128x128xbf16, #tpu.memory_space<vmem>>, vector<128x128xbf16>
      tpu.vector_store %arg8[%37, %c0_22], %36 {strides = array<i32>} : memref<128x128xbf16, #tpu.memory_space<vmem>>, vector<128x128xbf16>,
      %c1_i32_23 = arith.constant 1 : i32
    } else {
    }
    %12 = arith.index_cast %1 : i32 to index
    %c0 = arith.constant 0 : index
    %13 = vector.load %arg7[%12, %c0] : memref<128x128xbf16, #tpu.memory_space<vmem>>, vector<128x128xbf16>
    %c0_5 = arith.constant 0 : index
    %c0_6 = arith.constant 0 : index
    %14 = vector.load %arg8[%c0_5, %c0_6] : memref<128x128xbf16, #tpu.memory_space<vmem>>, vector<128x128xbf16>
    %cst = arith.constant dense<0.000000e+00> : vector<128x128xf32>
    %15 = tpu.matmul %13, %14, %cst {dimension_numbers = #tpu.dot_dimension_numbers<[1], [0], [0], [1], [0, 0, 1, 1], [], []>} : vector<128x128xbf16>, vector<128x128xbf16>, vector<128x128xf32> -> vector<128x128xf32>
    %c0_7 = arith.constant 0 : index
    %c0_8 = arith.constant 0 : index
    %c0_9 = arith.constant 0 : index
    %16 = vector.load %arg5[%c0_7, %c0_8, %c0_9] : memref<1x1x128xf32, #tpu.memory_space<vmem>>, vector<1x1x128xf32>
    %17 = vector.shape_cast %16 : vector<1x1x128xf32> to vector<1x128xf32>
    %18 = vector.broadcast %17 : vector<1x128xf32> to vector<128x128xf32>
    %19 = arith.addf %15, %18 : vector<128x128xf32>
    %cst_10 = arith.constant 0.000000e+00 : f32
    %20 = vector.broadcast %cst_10 : f32 to vector<128x128xf32>
    %21 = arith.maximumf %19, %20 : vector<128x128xf32>
    %22 = arith.truncf %21 : vector<128x128xf32> to vector<128x128xbf16>
    %23 = arith.index_cast %1 : i32 to index
    %c0_11 = arith.constant 0 : index
    %24 = vector.load %arg9[%23, %c0_11] : memref<128x128xbf16, #tpu.memory_space<vmem>>, vector<128x128xbf16>
    tpu.vector_store %arg9[%23, %c0_11], %22 {strides = array<i32>} : memref<128x128xbf16, #tpu.memory_space<vmem>>, vector<128x128xbf16>,
    %25 = arith.truncf %21 : vector<128x128xf32> to vector<128x128xbf16>
    %c0_12 = arith.constant 0 : index
    %c0_13 = arith.constant 0 : index
    %26 = vector.load %arg6[%c0_12, %c0_13] : memref<128x128xbf16, #tpu.memory_space<vmem>>, vector<128x128xbf16>
    tpu.vector_store %arg6[%c0_12, %c0_13], %25 {strides = array<i32>} : memref<128x128xbf16, #tpu.memory_space<vmem>>, vector<128x128xbf16>,
    return
  }
  func.func @transform_1(%arg0: i32, %arg1: i32) -> (i32, i32) {
    %c0_i32 = arith.constant 0 : i32
    %c0_i32_0 = arith.constant 0 : i32
    %c0_i32_1 = arith.constant 0 : i32
    return %c0_i32, %c0_i32_0 : i32, i32
  }
  func.func @transform_2(%arg0: i32, %arg1: i32) -> (i32, i32, i32) {
    %c0_i32 = arith.constant 0 : i32
    %c0_i32_0 = arith.constant 0 : i32
    %c0_i32_1 = arith.constant 0 : i32
    return %arg0, %c0_i32, %c0_i32_0 : i32, i32, i32
  }
  func.func @transform_3(%arg0: i32, %arg1: i32) -> (i32, i32, i32) {
    %c0_i32 = arith.constant 0 : i32
    %c0_i32_0 = arith.constant 0 : i32
    %c0_i32_1 = arith.constant 0 : i32
    return %arg0, %c0_i32, %c0_i32_0 : i32, i32, i32
  }
  func.func @transform_4(%arg0: i32, %arg1: i32) -> (i32, i32) {
    %c0_i32 = arith.constant 0 : i32
    %c0_i32_0 = arith.constant 0 : i32
    return %arg1, %c0_i32 : i32, i32
  }
}

</mosaic_0001>

<llo_original>
// kernel: tpu_custom_call.1
$region0: #{tpu_custom_call.1}
  #allocation0 [shape = 'u32[]', space=smem, size = 0x4, offset = 0x4, fixed_abs, tag = 'smem constant byte address 0x4 - core index']
  #allocation1 [shape = 'u32[144,128]{1,0:T(1,128)}', space=vmem, size = 0x12000, scoped, tag = 'internal scratch']
  #allocation2 [shape = 'bf16[128,128]{1,0:T(8,128)(2,1)}', space=vmem, size = 0x8000, scoped, tag = 'scratch operand']
  #allocation3 [shape = 'bf16[128,128]{1,0:T(8,128)(2,1)}', space=vmem, size = 0x8000, scoped, tag = 'scratch operand']
  #allocation4 [shape = 'bf16[128,128]{1,0:T(8,128)(2,1)}', space=vmem, size = 0x8000, scoped, tag = 'scratch operand']
  #allocation12 [shape = 's32[]', space=sflag, size = 0x4, offset = 0, fixed_abs, tag = 'sflag constant byte address 0x0 - dummy sync flag']
  #allocation13 [shape = 's32[]', space=sflag, size = 0x4, offset = 0, fixed_abs, tag = 'sflag constant byte address 0x0 - dummy sync flag']
  #allocation14 [shape = 'u32[]', space=smem, size = 0x4, offset = 0x44, fixed_abs, tag = 'smem constant byte address 0x44 - assertion arg 0']
  #allocation15 [shape = 'u32[]', space=smem, size = 0x4, offset = 0x48, fixed_abs, tag = 'smem constant byte address 0x48 - assertion arg 1']
  %s0 = inlined_call_operand.hbm [shape: bf16[128,128], index: 0, kind: input, shape index: {}]
  %s1 = inlined_call_operand.hbm [shape: bf16[128,128], index: 1, kind: input, shape index: {}]
  %s2 = inlined_call_operand.hbm [shape: bf16[2,128,128], index: 2, kind: input, shape index: {}]
  %s3 = inlined_call_operand.vmem [shape: f32[2,1,128], index: 3, kind: input, shape index: {}]
  %s4 = inlined_call_operand.hbm [shape: bf16[128,128], index: 4, kind: output, shape index: {}]
  %s5 = sld [smem:[#allocation0]]
  $region66: #{tpu_custom_call.1} parent=0
    _
  %s7 = ssub.s32 1, %s5
  %s8 = scalar_select 0, %s7, %s5
  $region1: #{tpu_custom_call.1} parent=0
    #allocation5 [shape = 'u8[32768]{0}', space=vmem, size = 0x8000, scoped, tag = 'input window, operand 1, single buffered']
    #allocation6 [shape = 's32[2]{0}', space=sflag, size = 0x8, scoped, tag = 'scoped memory for tpu_custom_call.1']
    #allocation7 [shape = 's32[2]{0}', space=sflag, size = 0x8, scoped, tag = 'scoped memory for tpu_custom_call.1']
    #allocation8 [shape = 'u8[65536]{0}', space=vmem, size = 0x10000, scoped, tag = 'input window, operand 2']
    #allocation9 [shape = 's32[2]{0}', space=sflag, size = 0x8, scoped, tag = 'scoped memory for tpu_custom_call.1']
    #allocation10 [shape = 'u8[32768]{0}', space=vmem, size = 0x8000, scoped, tag = 'output window, operand 0, single buffered']
    %9 = vsyncpa [#allocation6], 0
    %10 = vsyncpa [#allocation9], 0
    %s11 = scalar_lea.sflag [#allocation9], 1
    %12 = vsyncpa %s11, 0
    %13 = vsyncpa [#allocation7], 0
    loop: start=0, step=1, limit=4
    $region2: #{tpu_custom_call.1} parent=1 // loop_pre_header
      _
    $region3: #{tpu_custom_call.1} parent=1 // loop_header
      %s15 = sphi 0, %s19
      %p16 = scmp.ge.s32.totalorder %s15, 4
      %s22 = sphi 0, %s34
      %s23 = sphi 0, %s30
      %s24 = sphi 0, %s22
      %s25 = sphi 0, %s23
      %s26 = sphi 0, %s24
      %s27 = sphi 0, %s25
      %s35 = sphi 0, %s35
      %s37 = sphi 0, %s35
      %s38 = sphi 0, %s37
      %s52 = sphi 0, %s38
      %s58 = sphi 0, %s60
      %s61 = sphi 0, %s58
      %s62 = sphi 0, %s61
      %s78 = sphi 0, %s62
      %s84 = sphi 0, %s86
      %s87 = sphi 0, %s84
      %s88 = sphi 0, %s87
      %s104 = sphi 0, %s88
      %s110 = sphi 0, %s112
      %s113 = sphi 0, %s110
      %s114 = sphi 0, %s113
      %s130 = sphi 0, %s114
    $region4: #{tpu_custom_call.1} parent=1 // loop_header_branch
      %18 = sbr.rel (%p16) target = $region8
    $region5: #{tpu_custom_call.1} parent=1 // loop_body
      %s20 = ssub.s32 %s15, 1
      %s21 = ssub.s32 %s15, 2
      %s28 = sadd.s32 1, %s23
      %p29 = scmp.ge.s32.totalorder %s28, 1
      %s30 = scalar_select %p29, 0, %s28
      %s31 = sadd.s32 1, %s22
      %s32 = scalar_select %p29, %s31, %s22
      %p33 = scmp.ge.s32.totalorder %s32, 2
      %s34 = scalar_select %p33, 0, %s32
      %s36 = sadd.s32 %s35, 1
      %p39 = scmp.eq.s32.totalorder %s15, 1
      %p40 = scmp.ne.s32.totalorder %s35, %s37
      %p41 = scmp.eq.s32.totalorder %s15, 0
      %p42 = por %p40, %p41
      %p43 = scmp.ne.s32.totalorder %s35, %s37
      %p44 = scmp.eq.s32.totalorder %s20, 1
      %p45 = por %p43, %p44
      %p46 = scmp.ne.s32.totalorder %s37, %s38
      %p47 = scmp.eq.s32.totalorder %s20, 0
      %p48 = por %p46, %p47
      %p49 = scmp.ne.s32.totalorder %s37, %s38
      %p50 = scmp.eq.s32.totalorder %s21, 1
      %p51 = por %p49, %p50
      %p53 = scmp.ne.s32.totalorder %s38, %s52
      %p54 = scmp.eq.s32.totalorder %s21, 0
      %p55 = por %p53, %p54
      %s56 = ssub.s32 %s22, %s34
      %p57 = scmp.eq.s32.totalorder %s56, 0
      %s59 = sadd.s32 %s58, 1
      %s60 = scalar_select %p57, %s58, %s59
      %p63 = pneg %p57
      %p64 = scmp.eq.s32.totalorder %s15, 1
      %p65 = por %p63, %p64
      %p66 = scmp.ne.s32.totalorder %s58, %s61
      %p67 = scmp.eq.s32.totalorder %s15, 0
      %p68 = por %p66, %p67
      %p69 = scmp.ne.s32.totalorder %s58, %s61
      %p70 = scmp.eq.s32.totalorder %s20, 1
      %p71 = por %p69, %p70
      %p72 = scmp.ne.s32.totalorder %s61, %s62
      %p73 = scmp.eq.s32.totalorder %s20, 0
      %p74 = por %p72, %p73
      %p75 = scmp.ne.s32.totalorder %s61, %s62
      %p76 = scmp.eq.s32.totalorder %s21, 1
      %p77 = por %p75, %p76
      %p79 = scmp.ne.s32.totalorder %s62, %s78
      %p80 = scmp.eq.s32.totalorder %s21, 0
      %p81 = por %p79, %p80
      %s82 = ssub.s32 %s22, %s34
      %p83 = scmp.eq.s32.totalorder %s82, 0
      %s85 = sadd.s32 %s84, 1
      %s86 = scalar_select %p83, %s84, %s85
      %p89 = pneg %p83
      %p90 = scmp.eq.s32.totalorder %s15, 1
      %p91 = por %p89, %p90
      %p92 = scmp.ne.s32.totalorder %s84, %s87
      %p93 = scmp.eq.s32.totalorder %s15, 0
      %p94 = por %p92, %p93
      %p95 = scmp.ne.s32.totalorder %s84, %s87
      %p96 = scmp.eq.s32.totalorder %s20, 1
      %p97 = por %p95, %p96
      %p98 = scmp.ne.s32.totalorder %s87, %s88
      %p99 = scmp.eq.s32.totalorder %s20, 0
      %p100 = por %p98, %p99
      %p101 = scmp.ne.s32.totalorder %s87, %s88
      %p102 = scmp.eq.s32.totalorder %s21, 1
      %p103 = por %p101, %p102
      %p105 = scmp.ne.s32.totalorder %s88, %s104
      %p106 = scmp.eq.s32.totalorder %s21, 0
      %p107 = por %p105, %p106
      %s108 = ssub.s32 %s23, %s30
      %p109 = scmp.eq.s32.totalorder %s108, 0
      %s111 = sadd.s32 %s110, 1
      %s112 = scalar_select %p109, %s110, %s111
      %p115 = pneg %p109
      %p116 = scmp.eq.s32.totalorder %s15, 1
      %p117 = por %p115, %p116
      %p118 = scmp.ne.s32.totalorder %s110, %s113
      %p119 = scmp.eq.s32.totalorder %s15, 0
      %p120 = por %p118, %p119
      %p121 = scmp.ne.s32.totalorder %s110, %s113
      %p122 = scmp.eq.s32.totalorder %s20, 1
      %p123 = por %p121, %p122
      %p124 = scmp.ne.s32.totalorder %s113, %s114
      %p125 = scmp.eq.s32.totalorder %s20, 0
      %p126 = por %p124, %p125
      %p127 = scmp.ne.s32.totalorder %s113, %s114
      %p128 = scmp.eq.s32.totalorder %s21, 1
      %p129 = por %p127, %p128
      %p131 = scmp.ne.s32.totalorder %s114, %s130
      %p132 = scmp.eq.s32.totalorder %s21, 0
      %p133 = por %p131, %p132
      %p134 = scmp.le.s32.totalorder 1, %s15
      %p135 = scmp.lt.s32.totalorder %s15, 3
      %p136 = pnand %p134, %p135
      %p137 = pneg %p136
      // Predicated region
      $region9: #{tpu_custom_call.1} parent=5 // pred_check
        _
      $region10: #{tpu_custom_call.1} parent=5 // pred_check_branch
        %139 = sbr.rel (%p136) target = $region12
      $region11: #{tpu_custom_call.1} parent=5 // pred_region
        %s140 = ssub.s32 %s15, 1
        // Predicated region
        $region13: #{tpu_custom_call.1} parent=11 // pred_check
          %p141 = pneg %p48
        $region14: #{tpu_custom_call.1} parent=11 // pred_check_branch
          %143 = sbr.rel (%p141) target = $region16
        $region15: #{tpu_custom_call.1} parent=11 // pred_region
          %s145 = ssub.s32 1024, 1024
          %146 = vsyncadd [#allocation6], %s145
          %s147 = sshll.u32 [#allocation5], 4
          %s148 = int_to_ptr.vmem [resolvable:$true] %s147
          %153 = dma.hbm_to_vmem [thread:$0]  %s1, 1024, %s148, [#allocation6], 64, 64, 4
        $region16: #{tpu_custom_call.1} parent=11 // pred_fallthru
          _
      $region12: #{tpu_custom_call.1} parent=5 // pred_fallthru
        _
      %p154 = scmp.lt.s32.totalorder %s15, 2
      // Predicated region
      $region17: #{tpu_custom_call.1} parent=5 // pred_check
        %p155 = pneg %p154
      $region18: #{tpu_custom_call.1} parent=5 // pred_check_branch
        %157 = sbr.rel (%p155) target = $region20
      $region19: #{tpu_custom_call.1} parent=5 // pred_region
        // Predicated region
        $region21: #{tpu_custom_call.1} parent=19 // pred_check
          %p158 = pneg %p68
        $region22: #{tpu_custom_call.1} parent=19 // pred_check_branch
          %160 = sbr.rel (%p158) target = $region24
        $region23: #{tpu_custom_call.1} parent=19 // pred_region
          %s161 = sand.u32 %s58, 1
          %s162 = scalar_lea.sflag [#allocation9], %s161
          %s163 = sand.u32 %s58, 1
          %s164 = smul.addr %s163, 64
          %s165 = scalar_lea.vmem [#allocation8], %s164
          %s167 = ssub.s32 1024, 1024
          %168 = vsyncadd %s162, %s167
          %s169 = smul.addr %s22, 16
          %s170 = smul.addr %s169, 64
          %s171 = scalar_lea.hbm %s2, %s170
          %s172 = sshll.u32 %s165, 4
          %s173 = int_to_ptr.vmem [resolvable:$true] %s172
          %178 = dma.hbm_to_vmem [thread:$0]  %s171, 1024, %s173, %s162, 64, 64, 4
        $region24: #{tpu_custom_call.1} parent=19 // pred_fallthru
          _
        // Predicated region
        $region25: #{tpu_custom_call.1} parent=19 // pred_check
          %p179 = pneg %p94
        $region26: #{tpu_custom_call.1} parent=19 // pred_check_branch
          %181 = sbr.rel (%p179) target = $region28
        $region27: #{tpu_custom_call.1} parent=19 // pred_region
          %p182 = scmp.lt.s32.totalorder %s22, 1
          %s183 = scalar_select %p182, %s22, 1
          %s184 = scalar_lea.vmem %s3, %s183
        $region28: #{tpu_custom_call.1} parent=19 // pred_fallthru
          _
      $region20: #{tpu_custom_call.1} parent=5 // pred_fallthru
        _
      %p185 = scmp.le.s32.totalorder 1, %s15
      %p186 = scmp.lt.s32.totalorder %s15, 3
      %p187 = pnand %p185, %p186
      %p188 = pneg %p187
      // Predicated region
      $region29: #{tpu_custom_call.1} parent=5 // pred_check
        _
      $region30: #{tpu_custom_call.1} parent=5 // pred_check_branch
        %190 = sbr.rel (%p187) target = $region32
      $region31: #{tpu_custom_call.1} parent=5 // pred_region
        %s191 = ssub.s32 %s15, 1
        // Predicated region
        $region33: #{tpu_custom_call.1} parent=31 // pred_check
          %p192 = pneg %p48
        $region34: #{tpu_custom_call.1} parent=31 // pred_check_branch
          %194 = sbr.rel (%p192) target = $region36
        $region35: #{tpu_custom_call.1} parent=31 // pred_region
          %195 = dma.done [#allocation6], 1024
        $region36: #{tpu_custom_call.1} parent=31 // pred_fallthru
          _
        %s196 = sand.u32 %s61, 1
        %s197 = scalar_lea.sflag [#allocation9], %s196
        %s198 = sand.u32 %s61, 1
        %s199 = smul.addr %s198, 64
        %s200 = scalar_lea.vmem [#allocation8], %s199
        // Predicated region
        $region37: #{tpu_custom_call.1} parent=31 // pred_check
          %p201 = pneg %p74
        $region38: #{tpu_custom_call.1} parent=31 // pred_check_branch
          %203 = sbr.rel (%p201) target = $region40
        $region39: #{tpu_custom_call.1} parent=31 // pred_region
          %204 = dma.done %s197, 1024
        $region40: #{tpu_custom_call.1} parent=31 // pred_fallthru
          _
        %p205 = pneg %p48
        %p206 = pneg %p45
        %s207 = sand.u32 %s61, 1
        %s208 = scalar_lea.sflag [#allocation9], %s207
        %s209 = sand.u32 %s61, 1
        %s210 = smul.addr %s209, 64
        %s211 = scalar_lea.vmem [#allocation8], %s210
        %p212 = pneg %p74
        %p213 = pneg %p71
        %p214 = scmp.lt.s32.totalorder %s24, 1
        %s215 = scalar_select %p214, %s24, 1
        %s216 = scalar_lea.vmem %s3, %s215
        %p217 = pneg %p100
        %p218 = pneg %p97
        %p219 = pneg %p126
        %p220 = pneg %p123
        %p221 = scmp.lt.s32.totalorder %s24, 1
        %s222 = scalar_select %p221, %s24, 1
        %s223 = scalar_lea.vmem %s3, %s222
        %s224 = smul.u32 16, %s25
        %s226 = smul.u32 %s25, 128
        %p227 = scmp.eq.s32.totalorder %s24, 0
        %p228 = scmp.eq.s32.totalorder %s25, 0
        %p229 = pnand %p227, %p228
        %p230 = pneg %p229
        // Predicated region
        $region41: #{tpu_custom_call.1} parent=31 // pred_check
          _
        $region42: #{tpu_custom_call.1} parent=31 // pred_check_branch
          %232 = sbr.rel (%p229) target = $region44
        $region43: #{tpu_custom_call.1} parent=31 // pred_region
          $region45: #{tpu_custom_call.1} parent=43
            #allocation11 [shape = 's32[1]{0}', space=sflag, size = 0x4, scoped, tag = 'scoped memory for tpu_custom_call.1']
            // Predicated region
            $region46: #{tpu_custom_call.1} parent=45 // pred_check
              _
            $region47: #{tpu_custom_call.1} parent=45 // pred_check_branch
              %234 = sbr.rel target = $region49
            $region48: #{tpu_custom_call.1} parent=45 // pred_region
              %235 = sst [smem:[#allocation14]] [#allocation13]
              %236 = sst [smem:[#allocation15]] [#allocation12]
            $region49: #{tpu_custom_call.1} parent=45 // pred_fallthru
              _
            %238 = shalt.err (0)
            %s240 = sshll.u32 [#allocation2], 4
            %s241 = int_to_ptr.vmem [resolvable:$true] %s240
            %243 = dma.hbm_to_vmem [thread:$0]  %s0, 1024, %s241, [#allocation11]
            %s244 = smul.u32 4, 16
            %s245 = smul.u32 %s244, 1
            %s246 = sshll.u32 %s245, 4
            %247 = dma.done [#allocation11], %s246
          %v248 = vld [vmem:[#allocation5] sm:$0xf]
          %v249 = vld [vmem:[#allocation5 + $0x4] sm:$0xf]
          %v250 = vld [vmem:[#allocation5 + $0x8] sm:$0xf]
          %v251 = vld [vmem:[#allocation5 + $0xc] sm:$0xf]
          %v252 = vld [vmem:[#allocation5 + $0x10] sm:$0xf]
          %v253 = vld [vmem:[#allocation5 + $0x14] sm:$0xf]
          %v254 = vld [vmem:[#allocation5 + $0x18] sm:$0xf]
          %v255 = vld [vmem:[#allocation5 + $0x1c] sm:$0xf]
          %v256 = vld [vmem:[#allocation5 + $0x20] sm:$0xf]
          %v257 = vld [vmem:[#allocation5 + $0x24] sm:$0xf]
          %v258 = vld [vmem:[#allocation5 + $0x28] sm:$0xf]
          %v259 = vld [vmem:[#allocation5 + $0x2c] sm:$0xf]
          %v260 = vld [vmem:[#allocation5 + $0x30] sm:$0xf]
          %v261 = vld [vmem:[#allocation5 + $0x34] sm:$0xf]
          %v262 = vld [vmem:[#allocation5 + $0x38] sm:$0xf]
          %v263 = vld [vmem:[#allocation5 + $0x3c] sm:$0xf]
          %264 = vst [vmem:[#allocation3] sm:$0xf] %v248
          %265 = vst [vmem:[#allocation3 + $0x4] sm:$0xf] %v249
          %266 = vst [vmem:[#allocation3 + $0x8] sm:$0xf] %v250
          %267 = vst [vmem:[#allocation3 + $0xc] sm:$0xf] %v251
          %268 = vst [vmem:[#allocation3 + $0x10] sm:$0xf] %v252
          %269 = vst [vmem:[#allocation3 + $0x14] sm:$0xf] %v253
          %270 = vst [vmem:[#allocation3 + $0x18] sm:$0xf] %v254
          %271 = vst [vmem:[#allocation3 + $0x1c] sm:$0xf] %v255
          %272 = vst [vmem:[#allocation3 + $0x20] sm:$0xf] %v256
          %273 = vst [vmem:[#allocation3 + $0x24] sm:$0xf] %v257
          %274 = vst [vmem:[#allocation3 + $0x28] sm:$0xf] %v258
          %275 = vst [vmem:[#allocation3 + $0x2c] sm:$0xf] %v259
          %276 = vst [vmem:[#allocation3 + $0x30] sm:$0xf] %v260
          %277 = vst [vmem:[#allocation3 + $0x34] sm:$0xf] %v261
          %278 = vst [vmem:[#allocation3 + $0x38] sm:$0xf] %v262
          %279 = vst [vmem:[#allocation3 + $0x3c] sm:$0xf] %v263
        $region44: #{tpu_custom_call.1} parent=31 // pred_fallthru
          _
        %p280 = scmp.gt.s32.totalorder %s24, 0
        %p281 = pnand %p280, %p228
        %p282 = pneg %p281
        // Predicated region
        $region50: #{tpu_custom_call.1} parent=31 // pred_check
          _
        $region51: #{tpu_custom_call.1} parent=31 // pred_check_branch
          %284 = sbr.rel (%p281) target = $region53
        $region52: #{tpu_custom_call.1} parent=31 // pred_region
          %v285 = vld [vmem:[#allocation4] sm:$0xf]
          %v286 = vld [vmem:[#allocation4 + $0x4] sm:$0xf]
          %v287 = vld [vmem:[#allocation4 + $0x8] sm:$0xf]
          %v288 = vld [vmem:[#allocation4 + $0xc] sm:$0xf]
          %v289 = vld [vmem:[#allocation4 + $0x10] sm:$0xf]
          %v290 = vld [vmem:[#allocation4 + $0x14] sm:$0xf]
          %v291 = vld [vmem:[#allocation4 + $0x18] sm:$0xf]
          %v292 = vld [vmem:[#allocation4 + $0x1c] sm:$0xf]
          %v293 = vld [vmem:[#allocation4 + $0x20] sm:$0xf]
          %v294 = vld [vmem:[#allocation4 + $0x24] sm:$0xf]
          %v295 = vld [vmem:[#allocation4 + $0x28] sm:$0xf]
          %v296 = vld [vmem:[#allocation4 + $0x2c] sm:$0xf]
          %v297 = vld [vmem:[#allocation4 + $0x30] sm:$0xf]
          %v298 = vld [vmem:[#allocation4 + $0x34] sm:$0xf]
          %v299 = vld [vmem:[#allocation4 + $0x38] sm:$0xf]
          %v300 = vld [vmem:[#allocation4 + $0x3c] sm:$0xf]
          %v301 = vld [vmem:[%s200] sm:$0xf]
          %v302 = vld [vmem:[%s200 + $0x4] sm:$0xf]
          %v303 = vld [vmem:[%s200 + $0x8] sm:$0xf]
          %v304 = vld [vmem:[%s200 + $0xc] sm:$0xf]
          %v305 = vld [vmem:[%s200 + $0x10] sm:$0xf]
          %v306 = vld [vmem:[%s200 + $0x14] sm:$0xf]
          %v307 = vld [vmem:[%s200 + $0x18] sm:$0xf]
          %v308 = vld [vmem:[%s200 + $0x1c] sm:$0xf]
          %v309 = vld [vmem:[%s200 + $0x20] sm:$0xf]
          %v310 = vld [vmem:[%s200 + $0x24] sm:$0xf]
          %v311 = vld [vmem:[%s200 + $0x28] sm:$0xf]
          %v312 = vld [vmem:[%s200 + $0x2c] sm:$0xf]
          %v313 = vld [vmem:[%s200 + $0x30] sm:$0xf]
          %v314 = vld [vmem:[%s200 + $0x34] sm:$0xf]
          %v315 = vld [vmem:[%s200 + $0x38] sm:$0xf]
          %v316 = vld [vmem:[%s200 + $0x3c] sm:$0xf]
          %v333 = vunpack.c.l.b16 %v285
          %v334 = vunpack.c.l.b16 %v286
          %v335 = vunpack.c.l.b16 %v287
          %v336 = vunpack.c.l.b16 %v288
          %v337 = vunpack.c.l.b16 %v289
          %v338 = vunpack.c.l.b16 %v290
          %v339 = vunpack.c.l.b16 %v291
          %v340 = vunpack.c.l.b16 %v292
          %v341 = vunpack.c.l.b16 %v293
          %v342 = vunpack.c.l.b16 %v294
          %v343 = vunpack.c.l.b16 %v295
          %v344 = vunpack.c.l.b16 %v296
          %v345 = vunpack.c.l.b16 %v297
          %v346 = vunpack.c.l.b16 %v298
          %v347 = vunpack.c.l.b16 %v299
          %v348 = vunpack.c.l.b16 %v300
          %v349 = vpack.c.b16 %v334, %v333
          %v350 = vpack.c.b16 %v336, %v335
          %v351 = vpack.c.b16 %v338, %v337
          %v352 = vpack.c.b16 %v340, %v339
          %v353 = vpack.c.b16 %v342, %v341
          %v354 = vpack.c.b16 %v344, %v343
          %v355 = vpack.c.b16 %v346, %v345
          %v356 = vpack.c.b16 %v348, %v347
          %v381 = vunpack.c.l.b16 %v301
          %v382 = vunpack.c.l.b16 %v302
          %v383 = vunpack.c.l.b16 %v303
          %v384 = vunpack.c.l.b16 %v304
          %v385 = vunpack.c.l.b16 %v305
          %v386 = vunpack.c.l.b16 %v306
          %v387 = vunpack.c.l.b16 %v307
          %v388 = vunpack.c.l.b16 %v308
          %v389 = vunpack.c.l.b16 %v309
          %v390 = vunpack.c.l.b16 %v310
          %v391 = vunpack.c.l.b16 %v311
          %v392 = vunpack.c.l.b16 %v312
          %v393 = vunpack.c.l.b16 %v313
          %v394 = vunpack.c.l.b16 %v314
          %v395 = vunpack.c.l.b16 %v315
          %v396 = vunpack.c.l.b16 %v316
          %v397 = vpack.c.b16 %v382, %v381
          %v398 = vpack.c.b16 %v384, %v383
          %v399 = vpack.c.b16 %v386, %v385
          %v400 = vpack.c.b16 %v388, %v387
          %v401 = vpack.c.b16 %v390, %v389
          %v402 = vpack.c.b16 %v392, %v391
          %v403 = vpack.c.b16 %v394, %v393
          %v404 = vpack.c.b16 %v396, %v395
          %413 = vmatprep.subr.bf16.mxu0 0
          %414 = vmatpush1.bf16.msra.mxu0 %v404
          %415 = vmatprep.subr.bf16.mxu0 0
          %416 = vmatpush1.bf16.msra.mxu0 %v403
          %417 = vmatprep.subr.bf16.mxu0 0
          %418 = vmatpush1.bf16.msra.mxu0 %v402
          %419 = vmatprep.subr.bf16.mxu0 0
          %420 = vmatpush1.bf16.msra.mxu0 %v401
          %421 = vmatprep.subr.bf16.mxu0 0
          %422 = vmatpush1.bf16.msra.mxu0 %v400
          %423 = vmatprep.subr.bf16.mxu0 0
          %424 = vmatpush1.bf16.msra.mxu0 %v399
          %425 = vmatprep.subr.bf16.mxu0 0
          %426 = vmatpush1.bf16.msra.mxu0 %v398
          %427 = vmatprep.subr.bf16.mxu0 0
          %428 = vmatpush1.bf16.msra.mxu0 %v397
          %429 = vmatprep.subr.bf16.mxu0 0
          %430 = vmatpush2.bf16.msra.mxu0 0
          %431 = vmatprep.subr.bf16.mxu0 0
          %432 = vmatpush2.bf16.msra.mxu0 0
          %433 = vmatprep.subr.bf16.mxu0 0
          %434 = vmatpush2.bf16.msra.mxu0 0
          %435 = vmatprep.subr.bf16.mxu0 0
          %436 = vmatpush2.bf16.msra.mxu0 0
          %437 = vmatprep.subr.bf16.mxu0 0
          %438 = vmatpush2.bf16.msra.mxu0 0
          %439 = vmatprep.subr.bf16.mxu0 0
          %440 = vmatpush2.bf16.msra.mxu0 0
          %441 = vmatprep.subr.bf16.mxu0 0
          %442 = vmatpush2.bf16.msra.mxu0 0
          %443 = vmatprep.subr.bf16.mxu0 0
          %444 = vmatpush2.bf16.msra.mxu0 0
          %445 = vmatprep.mubr.bf16.mxu0 0
          %446 = vmatmul.mubr.bf16.gmra.mxu0 %v349
          %v447 = vpop.f32.mrf.mxu0
          %v448 = vadd.f32 0.0, %v447
          %v449 = vpop.f32.mrf.mxu0
          %v450 = vpop.f32.mrf.mxu0
          %v451 = vadd.f32 0.0, %v450
          %v452 = vpop.f32.mrf.mxu0
          %453 = vmatprep.mubr.bf16.mxu0 0
          %454 = vmatmul.mubr.bf16.gmra.mxu0 %v350
          %v455 = vpop.f32.mrf.mxu0
          %v456 = vadd.f32 0.0, %v455
          %v457 = vpop.f32.mrf.mxu0
          %v458 = vpop.f32.mrf.mxu0
          %v459 = vadd.f32 0.0, %v458
          %v460 = vpop.f32.mrf.mxu0
          %461 = vmatprep.mubr.bf16.mxu0 0
          %462 = vmatmul.mubr.bf16.gmra.mxu0 %v351
          %v463 = vpop.f32.mrf.mxu0
          %v464 = vadd.f32 0.0, %v463
          %v465 = vpop.f32.mrf.mxu0
          %v466 = vpop.f32.mrf.mxu0
          %v467 = vadd.f32 0.0, %v466
          %v468 = vpop.f32.mrf.mxu0
          %469 = vmatprep.mubr.bf16.mxu0 0
          %470 = vmatmul.mubr.bf16.gmra.mxu0 %v352
          %v471 = vpop.f32.mrf.mxu0
          %v472 = vadd.f32 0.0, %v471
          %v473 = vpop.f32.mrf.mxu0
          %v474 = vpop.f32.mrf.mxu0
          %v475 = vadd.f32 0.0, %v474
          %v476 = vpop.f32.mrf.mxu0
          %477 = vmatprep.mubr.bf16.mxu0 0
          %478 = vmatmul.mubr.bf16.gmra.mxu0 %v353
          %v479 = vpop.f32.mrf.mxu0
          %v480 = vadd.f32 0.0, %v479
          %v481 = vpop.f32.mrf.mxu0
          %v482 = vpop.f32.mrf.mxu0
          %v483 = vadd.f32 0.0, %v482
          %v484 = vpop.f32.mrf.mxu0
          %485 = vmatprep.mubr.bf16.mxu0 0
          %486 = vmatmul.mubr.bf16.gmra.mxu0 %v354
          %v487 = vpop.f32.mrf.mxu0
          %v488 = vadd.f32 0.0, %v487
          %v489 = vpop.f32.mrf.mxu0
          %v490 = vpop.f32.mrf.mxu0
          %v491 = vadd.f32 0.0, %v490
          %v492 = vpop.f32.mrf.mxu0
          %493 = vmatprep.mubr.bf16.mxu0 0
          %494 = vmatmul.mubr.bf16.gmra.mxu0 %v355
          %v495 = vpop.f32.mrf.mxu0
          %v496 = vadd.f32 0.0, %v495
          %v497 = vpop.f32.mrf.mxu0
          %v498 = vpop.f32.mrf.mxu0
          %v499 = vadd.f32 0.0, %v498
          %v500 = vpop.f32.mrf.mxu0
          %501 = vmatprep.mubr.bf16.mxu0 0
          %502 = vmatmul.mubr.bf16.gmra.mxu0 %v356
          %v503 = vpop.f32.mrf.mxu0
          %v504 = vadd.f32 0.0, %v503
          %v505 = vpop.f32.mrf.mxu0
          %v506 = vpop.f32.mrf.mxu0
          %v507 = vadd.f32 0.0, %v506
          %v508 = vpop.f32.mrf.mxu0
          %509 = vdwg.mxu0
          %v510 = vpack.c.bf16 %v451, %v448
          %v511 = vpack.c.bf16 %v459, %v456
          %v512 = vpack.c.bf16 %v467, %v464
          %v513 = vpack.c.bf16 %v475, %v472
          %v514 = vpack.c.bf16 %v483, %v480
          %v515 = vpack.c.bf16 %v491, %v488
          %v516 = vpack.c.bf16 %v499, %v496
          %v517 = vpack.c.bf16 %v507, %v504
          %v526 = vunpack.c.l.b16 %v510
          %v527 = vunpack.c.h.b16 %v510
          %v528 = vunpack.c.l.b16 %v511
          %v529 = vunpack.c.h.b16 %v511
          %v530 = vunpack.c.l.b16 %v512
          %v531 = vunpack.c.h.b16 %v512
          %v532 = vunpack.c.l.b16 %v513
          %v533 = vunpack.c.h.b16 %v513
          %v534 = vunpack.c.l.b16 %v514
          %v535 = vunpack.c.h.b16 %v514
          %v536 = vunpack.c.l.b16 %v515
          %v537 = vunpack.c.h.b16 %v515
          %v538 = vunpack.c.l.b16 %v516
          %v539 = vunpack.c.h.b16 %v516
          %v540 = vunpack.c.l.b16 %v517
          %v541 = vunpack.c.h.b16 %v517
          %v542 = vpack.c.b16 %v526, %v526
          %v543 = vpack.c.b16 %v527, %v527
          %v544 = vpack.c.b16 %v528, %v528
          %v545 = vpack.c.b16 %v529, %v529
          %v546 = vpack.c.b16 %v530, %v530
          %v547 = vpack.c.b16 %v531, %v531
          %v548 = vpack.c.b16 %v532, %v532
          %v549 = vpack.c.b16 %v533, %v533
          %v550 = vpack.c.b16 %v534, %v534
          %v551 = vpack.c.b16 %v535, %v535
          %v552 = vpack.c.b16 %v536, %v536
          %v553 = vpack.c.b16 %v537, %v537
          %v554 = vpack.c.b16 %v538, %v538
          %v555 = vpack.c.b16 %v539, %v539
          %v556 = vpack.c.b16 %v540, %v540
          %v557 = vpack.c.b16 %v541, %v541
          %574 = vst [vmem:[#allocation3] sm:$0xf] %v542
          %575 = vst [vmem:[#allocation3 + $0x4] sm:$0xf] %v543
          %576 = vst [vmem:[#allocation3 + $0x8] sm:$0xf] %v544
          %577 = vst [vmem:[#allocation3 + $0xc] sm:$0xf] %v545
          %578 = vst [vmem:[#allocation3 + $0x10] sm:$0xf] %v546
          %579 = vst [vmem:[#allocation3 + $0x14] sm:$0xf] %v547
          %580 = vst [vmem:[#allocation3 + $0x18] sm:$0xf] %v548
          %581 = vst [vmem:[#allocation3 + $0x1c] sm:$0xf] %v549
          %582 = vst [vmem:[#allocation3 + $0x20] sm:$0xf] %v550
          %583 = vst [vmem:[#allocation3 + $0x24] sm:$0xf] %v551
          %584 = vst [vmem:[#allocation3 + $0x28] sm:$0xf] %v552
          %585 = vst [vmem:[#allocation3 + $0x2c] sm:$0xf] %v553
          %586 = vst [vmem:[#allocation3 + $0x30] sm:$0xf] %v554
          %587 = vst [vmem:[#allocation3 + $0x34] sm:$0xf] %v555
          %588 = vst [vmem:[#allocation3 + $0x38] sm:$0xf] %v556
          %589 = vst [vmem:[#allocation3 + $0x3c] sm:$0xf] %v557
        $region53: #{tpu_custom_call.1} parent=31 // pred_fallthru
          _
        %s590 = sshra.s32 %s226, 3
        %s591 = sand.u32 %s226, 7
        %s592 = smul.addr %s590, 4
        %s593 = scalar_lea.vmem [#allocation2], %s592
        %v594 = vld [vmem:[%s593] sm:$0xf]
        %v595 = vld [vmem:[%s593 + $0x4] sm:$0xf]
        %v596 = vld [vmem:[%s593 + $0x8] sm:$0xf]
        %v597 = vld [vmem:[%s593 + $0xc] sm:$0xf]
        %v598 = vld [vmem:[%s593 + $0x10] sm:$0xf]
        %v599 = vld [vmem:[%s593 + $0x14] sm:$0xf]
        %v600 = vld [vmem:[%s593 + $0x18] sm:$0xf]
        %v601 = vld [vmem:[%s593 + $0x1c] sm:$0xf]
        %v602 = vld [vmem:[%s593 + $0x20] sm:$0xf]
        %v603 = vld [vmem:[%s593 + $0x24] sm:$0xf]
        %v604 = vld [vmem:[%s593 + $0x28] sm:$0xf]
        %v605 = vld [vmem:[%s593 + $0x2c] sm:$0xf]
        %v606 = vld [vmem:[%s593 + $0x30] sm:$0xf]
        %v607 = vld [vmem:[%s593 + $0x34] sm:$0xf]
        %v608 = vld [vmem:[%s593 + $0x38] sm:$0xf]
        %v609 = vld [vmem:[%s593 + $0x3c] sm:$0xf]
        %v610 = vld [vmem:[#allocation3] sm:$0xf]
        %v611 = vld [vmem:[#allocation3 + $0x4] sm:$0xf]
        %v612 = vld [vmem:[#allocation3 + $0x8] sm:$0xf]
        %v613 = vld [vmem:[#allocation3 + $0xc] sm:$0xf]
        %v614 = vld [vmem:[#allocation3 + $0x10] sm:$0xf]
        %v615 = vld [vmem:[#allocation3 + $0x14] sm:$0xf]
        %v616 = vld [vmem:[#allocation3 + $0x18] sm:$0xf]
        %v617 = vld [vmem:[#allocation3 + $0x1c] sm:$0xf]
        %v618 = vld [vmem:[#allocation3 + $0x20] sm:$0xf]
        %v619 = vld [vmem:[#allocation3 + $0x24] sm:$0xf]
        %v620 = vld [vmem:[#allocation3 + $0x28] sm:$0xf]
        %v621 = vld [vmem:[#allocation3 + $0x2c] sm:$0xf]
        %v622 = vld [vmem:[#allocation3 + $0x30] sm:$0xf]
        %v623 = vld [vmem:[#allocation3 + $0x34] sm:$0xf]
        %v624 = vld [vmem:[#allocation3 + $0x38] sm:$0xf]
        %v625 = vld [vmem:[#allocation3 + $0x3c] sm:$0xf]
        %v626 = vld [vmem:[%s223] sm:$0x1]
        %v628 = vlaneseq
        %v629 = vshrl.u32 %v628, 7
        %v630 = vsub.s32 0, %v629
        %v631 = vrot.slane %v626, %v630
        %v649 = vunpack.c.l.b16 %v594
        %v650 = vunpack.c.l.b16 %v595
        %v651 = vunpack.c.l.b16 %v596
        %v652 = vunpack.c.l.b16 %v597
        %v653 = vunpack.c.l.b16 %v598
        %v654 = vunpack.c.l.b16 %v599
        %v655 = vunpack.c.l.b16 %v600
        %v656 = vunpack.c.l.b16 %v601
        %v657 = vunpack.c.l.b16 %v602
        %v658 = vunpack.c.l.b16 %v603
        %v659 = vunpack.c.l.b16 %v604
        %v660 = vunpack.c.l.b16 %v605
        %v661 = vunpack.c.l.b16 %v606
        %v662 = vunpack.c.l.b16 %v607
        %v663 = vunpack.c.l.b16 %v608
        %v664 = vunpack.c.l.b16 %v609
        %v665 = vpack.c.b16 %v650, %v649
        %v666 = vpack.c.b16 %v652, %v651
        %v667 = vpack.c.b16 %v654, %v653
        %v668 = vpack.c.b16 %v656, %v655
        %v669 = vpack.c.b16 %v658, %v657
        %v670 = vpack.c.b16 %v660, %v659
        %v671 = vpack.c.b16 %v662, %v661
        %v672 = vpack.c.b16 %v664, %v663
        %v697 = vunpack.c.l.b16 %v610
        %v698 = vunpack.c.l.b16 %v611
        %v699 = vunpack.c.l.b16 %v612
        %v700 = vunpack.c.l.b16 %v613
        %v701 = vunpack.c.l.b16 %v614
        %v702 = vunpack.c.l.b16 %v615
        %v703 = vunpack.c.l.b16 %v616
        %v704 = vunpack.c.l.b16 %v617
        %v705 = vunpack.c.l.b16 %v618
        %v706 = vunpack.c.l.b16 %v619
        %v707 = vunpack.c.l.b16 %v620
        %v708 = vunpack.c.l.b16 %v621
        %v709 = vunpack.c.l.b16 %v622
        %v710 = vunpack.c.l.b16 %v623
        %v711 = vunpack.c.l.b16 %v624
        %v712 = vunpack.c.l.b16 %v625
        %v713 = vpack.c.b16 %v698, %v697
        %v714 = vpack.c.b16 %v700, %v699
        %v715 = vpack.c.b16 %v702, %v701
        %v716 = vpack.c.b16 %v704, %v703
        %v717 = vpack.c.b16 %v706, %v705
        %v718 = vpack.c.b16 %v708, %v707
        %v719 = vpack.c.b16 %v710, %v709
        %v720 = vpack.c.b16 %v712, %v711
        %729 = vmatprep.subr.bf16.mxu0 0
        %730 = vmatpush1.bf16.msra.mxu0 %v720
        %731 = vmatprep.subr.bf16.mxu0 0
        %732 = vmatpush1.bf16.msra.mxu0 %v719
        %733 = vmatprep.subr.bf16.mxu0 0
        %734 = vmatpush1.bf16.msra.mxu0 %v718
        %735 = vmatprep.subr.bf16.mxu0 0
        %736 = vmatpush1.bf16.msra.mxu0 %v717
        %737 = vmatprep.subr.bf16.mxu0 0
        %738 = vmatpush1.bf16.msra.mxu0 %v716
        %739 = vmatprep.subr.bf16.mxu0 0
        %740 = vmatpush1.bf16.msra.mxu0 %v715
        %741 = vmatprep.subr.bf16.mxu0 0
        %742 = vmatpush1.bf16.msra.mxu0 %v714
        %743 = vmatprep.subr.bf16.mxu0 0
        %744 = vmatpush1.bf16.msra.mxu0 %v713
        %745 = vmatprep.subr.bf16.mxu0 0
        %746 = vmatpush2.bf16.msra.mxu0 0
        %747 = vmatprep.subr.bf16.mxu0 0
        %748 = vmatpush2.bf16.msra.mxu0 0
        %749 = vmatprep.subr.bf16.mxu0 0
        %750 = vmatpush2.bf16.msra.mxu0 0
        %751 = vmatprep.subr.bf16.mxu0 0
        %752 = vmatpush2.bf16.msra.mxu0 0
        %753 = vmatprep.subr.bf16.mxu0 0
        %754 = vmatpush2.bf16.msra.mxu0 0
        %755 = vmatprep.subr.bf16.mxu0 0
        %756 = vmatpush2.bf16.msra.mxu0 0
        %757 = vmatprep.subr.bf16.mxu0 0
        %758 = vmatpush2.bf16.msra.mxu0 0
        %759 = vmatprep.subr.bf16.mxu0 0
        %760 = vmatpush2.bf16.msra.mxu0 0
        %761 = vmatprep.mubr.bf16.mxu0 0
        %762 = vmatmul.mubr.bf16.gmra.mxu0 %v665
        %v763 = vpop.f32.mrf.mxu0
        %v764 = vadd.f32 %v631, %v763
        %v765 = vpop.f32.mrf.mxu0
        %v766 = vpop.f32.mrf.mxu0
        %v767 = vadd.f32 %v631, %v766
        %v768 = vpop.f32.mrf.mxu0
        %769 = vmatprep.mubr.bf16.mxu0 0
        %770 = vmatmul.mubr.bf16.gmra.mxu0 %v666
        %v771 = vpop.f32.mrf.mxu0
        %v772 = vadd.f32 %v631, %v771
        %v773 = vpop.f32.mrf.mxu0
        %v774 = vpop.f32.mrf.mxu0
        %v775 = vadd.f32 %v631, %v774
        %v776 = vpop.f32.mrf.mxu0
        %777 = vmatprep.mubr.bf16.mxu0 0
        %778 = vmatmul.mubr.bf16.gmra.mxu0 %v667
        %v779 = vpop.f32.mrf.mxu0
        %v780 = vadd.f32 %v631, %v779
        %v781 = vpop.f32.mrf.mxu0
        %v782 = vpop.f32.mrf.mxu0
        %v783 = vadd.f32 %v631, %v782
        %v784 = vpop.f32.mrf.mxu0
        %785 = vmatprep.mubr.bf16.mxu0 0
        %786 = vmatmul.mubr.bf16.gmra.mxu0 %v668
        %v787 = vpop.f32.mrf.mxu0
        %v788 = vadd.f32 %v631, %v787
        %v789 = vpop.f32.mrf.mxu0
        %v790 = vpop.f32.mrf.mxu0
        %v791 = vadd.f32 %v631, %v790
        %v792 = vpop.f32.mrf.mxu0
        %793 = vmatprep.mubr.bf16.mxu0 0
        %794 = vmatmul.mubr.bf16.gmra.mxu0 %v669
        %v795 = vpop.f32.mrf.mxu0
        %v796 = vadd.f32 %v631, %v795
        %v797 = vpop.f32.mrf.mxu0
        %v798 = vpop.f32.mrf.mxu0
        %v799 = vadd.f32 %v631, %v798
        %v800 = vpop.f32.mrf.mxu0
        %801 = vmatprep.mubr.bf16.mxu0 0
        %802 = vmatmul.mubr.bf16.gmra.mxu0 %v670
        %v803 = vpop.f32.mrf.mxu0
        %v804 = vadd.f32 %v631, %v803
        %v805 = vpop.f32.mrf.mxu0
        %v806 = vpop.f32.mrf.mxu0
        %v807 = vadd.f32 %v631, %v806
        %v808 = vpop.f32.mrf.mxu0
        %809 = vmatprep.mubr.bf16.mxu0 0
        %810 = vmatmul.mubr.bf16.gmra.mxu0 %v671
        %v811 = vpop.f32.mrf.mxu0
        %v812 = vadd.f32 %v631, %v811
        %v813 = vpop.f32.mrf.mxu0
        %v814 = vpop.f32.mrf.mxu0
        %v815 = vadd.f32 %v631, %v814
        %v816 = vpop.f32.mrf.mxu0
        %817 = vmatprep.mubr.bf16.mxu0 0
        %818 = vmatmul.mubr.bf16.gmra.mxu0 %v672
        %v819 = vpop.f32.mrf.mxu0
        %v820 = vadd.f32 %v631, %v819
        %v821 = vpop.f32.mrf.mxu0
        %v822 = vpop.f32.mrf.mxu0
        %v823 = vadd.f32 %v631, %v822
        %v824 = vpop.f32.mrf.mxu0
        %825 = vdwg.mxu0
        %v826 = vmax.f32 %v764, 0.0
        %v827 = vmax.f32 %v767, 0.0
        %v828 = vmax.f32 %v772, 0.0
        %v829 = vmax.f32 %v775, 0.0
        %v830 = vmax.f32 %v780, 0.0
        %v831 = vmax.f32 %v783, 0.0
        %v832 = vmax.f32 %v788, 0.0
        %v833 = vmax.f32 %v791, 0.0
        %v834 = vmax.f32 %v796, 0.0
        %v835 = vmax.f32 %v799, 0.0
        %v836 = vmax.f32 %v804, 0.0
        %v837 = vmax.f32 %v807, 0.0
        %v838 = vmax.f32 %v812, 0.0
        %v839 = vmax.f32 %v815, 0.0
        %v840 = vmax.f32 %v820, 0.0
        %v841 = vmax.f32 %v823, 0.0
        %v842 = vpack.c.bf16 %v827, %v826
        %v843 = vpack.c.bf16 %v829, %v828
        %v844 = vpack.c.bf16 %v831, %v830
        %v845 = vpack.c.bf16 %v833, %v832
        %v846 = vpack.c.bf16 %v835, %v834
        %v847 = vpack.c.bf16 %v837, %v836
        %v848 = vpack.c.bf16 %v839, %v838
        %v849 = vpack.c.bf16 %v841, %v840
        %v858 = vunpack.c.l.b16 %v842
        %v859 = vunpack.c.h.b16 %v842
        %v860 = vunpack.c.l.b16 %v843
        %v861 = vunpack.c.h.b16 %v843
        %v862 = vunpack.c.l.b16 %v844
        %v863 = vunpack.c.h.b16 %v844
        %v864 = vunpack.c.l.b16 %v845
        %v865 = vunpack.c.h.b16 %v845
        %v866 = vunpack.c.l.b16 %v846
        %v867 = vunpack.c.h.b16 %v846
        %v868 = vunpack.c.l.b16 %v847
        %v869 = vunpack.c.h.b16 %v847
        %v870 = vunpack.c.l.b16 %v848
        %v871 = vunpack.c.h.b16 %v848
        %v872 = vunpack.c.l.b16 %v849
        %v873 = vunpack.c.h.b16 %v849
        %v874 = vpack.c.b16 %v858, %v858
        %v875 = vpack.c.b16 %v859, %v859
        %v876 = vpack.c.b16 %v860, %v860
        %v877 = vpack.c.b16 %v861, %v861
        %v878 = vpack.c.b16 %v862, %v862
        %v879 = vpack.c.b16 %v863, %v863
        %v880 = vpack.c.b16 %v864, %v864
        %v881 = vpack.c.b16 %v865, %v865
        %v882 = vpack.c.b16 %v866, %v866
        %v883 = vpack.c.b16 %v867, %v867
        %v884 = vpack.c.b16 %v868, %v868
        %v885 = vpack.c.b16 %v869, %v869
        %v886 = vpack.c.b16 %v870, %v870
        %v887 = vpack.c.b16 %v871, %v871
        %v888 = vpack.c.b16 %v872, %v872
        %v889 = vpack.c.b16 %v873, %v873
        %s906 = smul.addr %s590, 4
        %s907 = scalar_lea.vmem [#allocation4], %s906
        %908 = vst [vmem:[%s907] sm:$0xf] %v874
        %909 = vst [vmem:[%s907 + $0x4] sm:$0xf] %v875
        %910 = vst [vmem:[%s907 + $0x8] sm:$0xf] %v876
        %911 = vst [vmem:[%s907 + $0xc] sm:$0xf] %v877
        %912 = vst [vmem:[%s907 + $0x10] sm:$0xf] %v878
        %913 = vst [vmem:[%s907 + $0x14] sm:$0xf] %v879
        %914 = vst [vmem:[%s907 + $0x18] sm:$0xf] %v880
        %915 = vst [vmem:[%s907 + $0x1c] sm:$0xf] %v881
        %916 = vst [vmem:[%s907 + $0x20] sm:$0xf] %v882
        %917 = vst [vmem:[%s907 + $0x24] sm:$0xf] %v883
        %918 = vst [vmem:[%s907 + $0x28] sm:$0xf] %v884
        %919 = vst [vmem:[%s907 + $0x2c] sm:$0xf] %v885
        %920 = vst [vmem:[%s907 + $0x30] sm:$0xf] %v886
        %921 = vst [vmem:[%s907 + $0x34] sm:$0xf] %v887
        %922 = vst [vmem:[%s907 + $0x38] sm:$0xf] %v888
        %923 = vst [vmem:[%s907 + $0x3c] sm:$0xf] %v889
        %924 = vst [vmem:[#allocation10] sm:$0xf] %v874
        %925 = vst [vmem:[#allocation10 + $0x4] sm:$0xf] %v875
        %926 = vst [vmem:[#allocation10 + $0x8] sm:$0xf] %v876
        %927 = vst [vmem:[#allocation10 + $0xc] sm:$0xf] %v877
        %928 = vst [vmem:[#allocation10 + $0x10] sm:$0xf] %v878
        %929 = vst [vmem:[#allocation10 + $0x14] sm:$0xf] %v879
        %930 = vst [vmem:[#allocation10 + $0x18] sm:$0xf] %v880
        %931 = vst [vmem:[#allocation10 + $0x1c] sm:$0xf] %v881
        %932 = vst [vmem:[#allocation10 + $0x20] sm:$0xf] %v882
        %933 = vst [vmem:[#allocation10 + $0x24] sm:$0xf] %v883
        %934 = vst [vmem:[#allocation10 + $0x28] sm:$0xf] %v884
        %935 = vst [vmem:[#allocation10 + $0x2c] sm:$0xf] %v885
        %936 = vst [vmem:[#allocation10 + $0x30] sm:$0xf] %v886
        %937 = vst [vmem:[#allocation10 + $0x34] sm:$0xf] %v887
        %938 = vst [vmem:[#allocation10 + $0x38] sm:$0xf] %v888
        %939 = vst [vmem:[#allocation10 + $0x3c] sm:$0xf] %v889
        // Predicated region
        $region54: #{tpu_custom_call.1} parent=31 // pred_check
          %p940 = pneg %p123
        $region55: #{tpu_custom_call.1} parent=31 // pred_check_branch
          %942 = sbr.rel (%p940) target = $region57
        $region56: #{tpu_custom_call.1} parent=31 // pred_region
          %s943 = smul.u32 16, %s25
          %s945 = ssub.s32 1024, 1024
          %946 = vsyncadd [#allocation7], %s945
          %s947 = smul.addr %s943, 64
          %s948 = scalar_lea.hbm %s4, %s947
          %s949 = sshll.u32 [#allocation10], 4
          %s950 = int_to_ptr.vmem [resolvable:$true] %s949
          %955 = dma.vmem_to_hbm [thread:$0]  %s950, 1024, %s948, [#allocation7], 64, 64, 4
        $region57: #{tpu_custom_call.1} parent=31 // pred_fallthru
          _
        // Predicated region
        $region58: #{tpu_custom_call.1} parent=31 // pred_check
          %p956 = pneg %p123
        $region59: #{tpu_custom_call.1} parent=31 // pred_check_branch
          %958 = sbr.rel (%p956) target = $region61
        $region60: #{tpu_custom_call.1} parent=31 // pred_region
          %959 = dma.done [#allocation7], 1024
        $region61: #{tpu_custom_call.1} parent=31 // pred_fallthru
          _
      $region32: #{tpu_custom_call.1} parent=5 // pred_fallthru
        _
      %p960 = scmp.le.s32.totalorder 2, %s15
      // Predicated region
      $region62: #{tpu_custom_call.1} parent=5 // pred_check
        %p961 = pneg %p960
      $region63: #{tpu_custom_call.1} parent=5 // pred_check_branch
        %963 = sbr.rel (%p961) target = $region65
      $region64: #{tpu_custom_call.1} parent=5 // pred_region
        %s964 = ssub.s32 %s15, 2
      $region65: #{tpu_custom_call.1} parent=5 // pred_fallthru
        _
    $region6: #{tpu_custom_call.1} parent=1 // loop_footer
      %s19 = sadd.s32 1, %s15
    $region7: #{tpu_custom_call.1} parent=1 // loop_footer_branch
      %14 = sbr.rel target = $region3
    $region8: #{tpu_custom_call.1} parent=1 // loop_exit
      _
    %965 = vsyncpa [#allocation6], 1
    %s966 = scalar_lea.sflag [#allocation6], 1
    %967 = vsyncpa %s966, 1
    %968 = vsyncpa [#allocation9], 1
    %s969 = scalar_lea.sflag [#allocation9], 1
    %970 = vsyncpa %s969, 1
    %971 = vsyncpa [#allocation7], 1
    %s972 = scalar_lea.sflag [#allocation7], 1
    %973 = vsyncpa %s972, 1

</llo_original>
